<compile_context>
chip_gen: v5e
topology: v5e:2x2
jax: 0.10.0
libtpu: 0.0.40
codegen_flags: <defaults>
</compile_context>

<pallas_src>
import functools

import jax
import jax.numpy as jnp
from jax.experimental import pallas as pl
from jax.experimental.pallas import tpu as pltpu


def _f1_tp_kernel(x_ref, tgt_ref, tp_ref, *, n_total, tile_n, tiles_per_core):
    """Accumulate per-core true-positive counts into a resident (8,128) i32 block."""
    c = pl.program_id(0)               # core split ("parallel") axis
    i = pl.program_id(1)               # row-tile sweep ("arbitrary") axis
    linear = c * tiles_per_core + i    # logical tile index (may exceed real tile count)

    @pl.when(i == 0)
    def _init():
        tp_ref[...] = jnp.zeros_like(tp_ref)

    x = x_ref[...]                     # (TN, C), input dtype kept on the wire
    tgt = tgt_ref[...]                 # (TN, 1) int32
    tn, n_cls = x.shape

    # First-occurrence argmax along the class (lane) axis: one lane-max plus one
    # masked lane-min.  Two passes over the block, but the kernel is HBM-bound
    # so the extra vld pass hides under the DMA on all generations.
    col = jax.lax.broadcasted_iota(jnp.int32, (tn, n_cls), dimension=1)
    mx = jnp.max(x, axis=1, keepdims=True)                                   # (TN, 1)
    pred = jnp.min(jnp.where(x == mx, col, n_cls), axis=1, keepdims=True)    # (TN, 1) i32

    # Global-row mask handles (a) the ragged last tile and (b) duplicate clamped
    # tiles emitted when num_tiles does not divide evenly across cores (for those
    # linear*tile_n >= n_total, so every row masks out -> no double counting).
    row = jax.lax.broadcasted_iota(jnp.int32, (tn, 1), dimension=0) + linear * tile_n
    correct = ((row < n_total) & (pred == tgt)).astype(jnp.int32)            # (TN, 1)

    # Exact int32 accumulation, broadcast into the resident per-core block.
    tp_ref[...] += jnp.sum(correct, axis=0, keepdims=True)


def f1_score(output, target, *, tile_n=None, num_cores=2):
    """output: (N, C) float (f32/bf16), target: (N,) or (N, 1) int class ids -> () f32."""
    N, C = output.shape
    target = target.reshape(N, 1).astype(jnp.int32)

    itemsize = jnp.dtype(output.dtype).itemsize
    sub = 8 * max(1, 4 // itemsize)          # sublane multiple: f32 -> 8, bf16 -> 16, i8 -> 32
    lanes_c = pl.cdiv(C, 128) * 128          # class axis pads to 128 lanes in VMEM
    x_row_bytes = lanes_c * itemsize         # padded VMEM bytes per logits row
    t_row_bytes = 128 * 4                    # (TN, 1) i32 target row pads to 128 lanes

    if tile_n is None:
        # Budget ~16 MiB of *padded* VMEM for the double-buffered (x, target)
        # pipeline: big enough to amortize per-step overhead, small enough to fit
        # every generation's scoped-VMEM once vmem_limit_bytes is raised.
        budget = 16 * 1024 * 1024
        rows = budget // (2 * (x_row_bytes + t_row_bytes))
        tile_n = max(sub, (rows // sub) * sub)
        # Cap a single tile at one core's share of rows so the parallel axis
        # actually splits work across both v7x TensorCores.
        per_core = pl.cdiv(pl.cdiv(N, num_cores), sub) * sub
        tile_n = min(tile_n, max(sub, per_core))
    tile_n = max(sub, min(tile_n, pl.cdiv(N, sub) * sub))

    num_tiles = pl.cdiv(N, tile_n)
    tiles_per_core = pl.cdiv(num_tiles, num_cores)

    # Padded working-set accounting -> explicit scoped-VMEM limit with headroom.
    x_rows_pad = pl.cdiv(tile_n, sub) * sub
    t_rows_pad = pl.cdiv(tile_n, 8) * 8
    working_set = 2 * (x_rows_pad * x_row_bytes + t_rows_pad * t_row_bytes)
    working_set += num_cores * 8 * 128 * 4
    vmem_limit = int(min(max(32 << 20, working_set + (8 << 20)), 56 << 20))

    def row_block_map(c, i):
        # Clamp so no block is ever fully out of bounds; duplicates are masked
        # out inside the kernel via the global-row mask.
        return (jnp.minimum(c * tiles_per_core + i, num_tiles - 1), 0)

    kernel = functools.partial(
        _f1_tp_kernel, n_total=N, tile_n=tile_n, tiles_per_core=tiles_per_core)

    cost = pl.CostEstimate(
        flops=5 * N * C,
        transcendentals=0,
        bytes_accessed=N * C * itemsize + N * 4 + num_cores * 8 * 128 * 4,
    )

    tp_blocks = pl.pallas_call(
        kernel,
        out_shape=jax.ShapeDtypeStruct((num_cores * 8, 128), jnp.int32),
        grid=(num_cores, tiles_per_core),
        in_specs=[
            pl.BlockSpec((tile_n, C), row_block_map),
            pl.BlockSpec((tile_n, 1), row_block_map),
        ],
        out_specs=pl.BlockSpec((8, 128), lambda c, i: (c, 0)),
        compiler_params=pltpu.CompilerParams(
            dimension_semantics=("parallel", "arbitrary"),
            vmem_limit_bytes=vmem_limit),
        cost_estimate=cost,
    )(output, target)

    # Tiny epilogue in the wrapper: combine per-core TP partials and evaluate the
    # F1 formula exactly as the PyTorch module does (one-hot rows => FP = FN = N - TP).
    tp = jnp.sum(tp_blocks.reshape(num_cores, 8, 128)[:, 0, 0]).astype(jnp.float32)
    n = jnp.float32(N)
    fp = n - tp
    fn = n - tp
    precision = tp / (tp + fp + 1e-10)
    recall = tp / (tp + fn + 1e-10)
    return 2.0 * precision * recall / (precision + recall + 1e-10)


def _f1_reference(output, target):
    # Pure-JAX reference mirroring the PyTorch module (single call, zeroed counters).
    N, C = output.shape
    pred = jnp.argmax(output, axis=1)
    pred_oh = jax.nn.one_hot(pred, C, dtype=jnp.float32)
    tgt_oh = jax.nn.one_hot(target.reshape(-1), C, dtype=jnp.float32)
    TP = jnp.sum(pred_oh * tgt_oh)
    FP = jnp.sum(pred_oh * (1.0 - tgt_oh))
    FN = jnp.sum((1.0 - pred_oh) * tgt_oh)
    precision = TP / (TP + FP + 1e-10)
    recall = TP / (TP + FN + 1e-10)
    return 2.0 * precision * recall / (precision + recall + 1e-10)


if __name__ == "__main__":
    key = jax.random.PRNGKey(0)
    k1, k2, k3, k4, k5, k6 = jax.random.split(key, 6)

    # (1) Small single-tile case (module forward: output (N, C), target (N,)).
    N, C = 8, 16
    logits = jax.random.normal(k1, (N, C), dtype=jnp.float32)
    target = jax.random.randint(k2, (N,), 0, C, dtype=jnp.int32)
    f1 = f1_score(logits, target)
    jax.block_until_ready(f1)
    ref = _f1_reference(logits, target)
    assert jnp.allclose(f1, ref, atol=1e-6), (f1, ref)

    # (2) Multi-tile ragged case: exercises the grid accumulator, the clamped
    #     duplicate tile on the second core and the padded-row mask.
    N2, C2 = 20, 16
    logits2 = jax.random.normal(k3, (N2, C2), dtype=jnp.float32)
    target2 = jax.random.randint(k4, (N2,), 0, C2, dtype=jnp.int32)
    f1_tiled = f1_score(logits2, target2, tile_n=8)
    jax.block_until_ready(f1_tiled)
    ref2 = _f1_reference(logits2, target2)
    assert jnp.allclose(f1_tiled, ref2, atol=1e-6), (f1_tiled, ref2)

    # (3) Auto-tiled case: class count not a multiple of 128 and both halves of
    #     the parallel axis holding real rows.
    N3, C3 = 512, 10
    logits3 = jax.random.normal(k5, (N3, C3), dtype=jnp.float32)
    target3 = jax.random.randint(k6, (N3,), 0, C3, dtype=jnp.int32)
    f1_auto = f1_score(logits3, target3)
    jax.block_until_ready(f1_auto)
    ref3 = _f1_reference(logits3, target3)
    assert jnp.allclose(f1_auto, ref3, atol=1e-6), (f1_auto, ref3)

    print("KERNEL_OK")
</pallas_src>

<mosaic_0001>
module attributes {stable_mosaic.version = 11 : i64} {
  func.func @_f1_tp_kernel(%arg0: i32, %arg1: i32, %arg2: memref<8x16xf32, #tpu.memory_space<vmem>>, %arg3: memref<8x1xi32, #tpu.memory_space<vmem>>, %arg4: memref<8x128xi32, #tpu.memory_space<vmem>>) attributes {dimension_semantics = [#tpu.dimension_semantics<parallel>, #tpu.dimension_semantics<arbitrary>], iteration_bounds = array<i64: 2, 1>, scalar_prefetch = 0 : i64, scratch_operands = 0 : i64, tpu.core_type = #tpu.core_type<tc>, window_params = [{transform_indices = @transform_0, window_bounds = array<i64: 8, 16>}, {transform_indices = @transform_1, window_bounds = array<i64: 8, 1>}, {transform_indices = @transform_2, window_bounds = array<i64: 8, 128>}]} {
    %c1_i32 = arith.constant 1 : i32
    %0 = arith.muli %arg0, %c1_i32 : i32
    %1 = arith.addi %0, %arg1 : i32
    %c0_i32 = arith.constant 0 : i32
    %2 = arith.cmpi eq, %arg1, %c0_i32 : i32
    %3 = arith.extui %2 : i1 to i32
    %c0_i32_0 = arith.constant 0 : i32
    %4 = arith.cmpi ne, %3, %c0_i32_0 : i32
    scf.if %4 {
      %c0_i32_11 = arith.constant 0 : i32
      %31 = vector.broadcast %c0_i32_11 : i32 to vector<8x128xi32>
      %c0_12 = arith.constant 0 : index
      %c0_13 = arith.constant 0 : index
      %32 = vector.load %arg4[%c0_12, %c0_13] : memref<8x128xi32, #tpu.memory_space<vmem>>, vector<8x128xi32>
      tpu.vector_store %arg4[%c0_12, %c0_13], %31 {strides = array<i32>} : memref<8x128xi32, #tpu.memory_space<vmem>>, vector<8x128xi32>,
    } else {
    }
    %c0 = arith.constant 0 : index
    %c0_1 = arith.constant 0 : index
    %5 = vector.load %arg2[%c0, %c0_1] : memref<8x16xf32, #tpu.memory_space<vmem>>, vector<8x16xf32>
    %c0_2 = arith.constant 0 : index
    %c0_3 = arith.constant 0 : index
    %6 = vector.load %arg3[%c0_2, %c0_3] : memref<8x1xi32, #tpu.memory_space<vmem>>, vector<8x1xi32>
    %7 = tpu.iota {dimensions = array<i32: 1>} : vector<8x16xi32>
    %cst = arith.constant dense<0xFF800000> : vector<8xf32>
    %8 = vector.multi_reduction <maximumf>, %5, %cst [1] : vector<8x16xf32> to vector<8xf32>
    %9 = vector.shape_cast %8 : vector<8xf32> to vector<8x1xf32>
    %10 = vector.broadcast %9 : vector<8x1xf32> to vector<8x16xf32>
    %11 = arith.cmpf oeq, %5, %10 : vector<8x16xf32>
    %c16_i32 = arith.constant 16 : i32
    %12 = vector.broadcast %c16_i32 : i32 to vector<8x16xi32>
    %13 = arith.select %11, %7, %12 : vector<8x16xi1>, vector<8x16xi32>
    %cst_4 = arith.constant dense<2147483647> : vector<8xi32>
    %14 = vector.multi_reduction <minsi>, %13, %cst_4 [1] : vector<8x16xi32> to vector<8xi32>
    %15 = vector.shape_cast %14 : vector<8xi32> to vector<8x1xi32>
    %16 = tpu.iota {dimensions = array<i32: 0>} : vector<8x1xi32>
    %c8_i32 = arith.constant 8 : i32
    %17 = arith.muli %1, %c8_i32 : i32
    %18 = vector.broadcast %17 : i32 to vector<8x1xi32>
    %19 = arith.addi %16, %18 : vector<8x1xi32>
    %c8_i32_5 = arith.constant 8 : i32
    %20 = vector.broadcast %c8_i32_5 : i32 to vector<8x1xi32>
    %21 = arith.cmpi slt, %19, %20 : vector<8x1xi32>
    %22 = arith.cmpi eq, %15, %6 : vector<8x1xi32>
    %23 = arith.andi %21, %22 : vector<8x1xi1>
    %24 = arith.extui %23 : vector<8x1xi1> to vector<8x1xi32>
    %c0_6 = arith.constant 0 : index
    %c0_7 = arith.constant 0 : index
    %25 = vector.load %arg4[%c0_6, %c0_7] : memref<8x128xi32, #tpu.memory_space<vmem>>, vector<8x128xi32>
    %cst_8 = arith.constant dense<0> : vector<1xi32>
    %26 = vector.multi_reduction <add>, %24, %cst_8 [0] : vector<8x1xi32> to vector<1xi32>
    %27 = vector.shape_cast %26 : vector<1xi32> to vector<1x1xi32>
    %28 = vector.broadcast %27 : vector<1x1xi32> to vector<8x128xi32>
    %29 = arith.addi %25, %28 : vector<8x128xi32>
    %c0_9 = arith.constant 0 : index
    %c0_10 = arith.constant 0 : index
    %30 = vector.load %arg4[%c0_9, %c0_10] : memref<8x128xi32, #tpu.memory_space<vmem>>, vector<8x128xi32>
    tpu.vector_store %arg4[%c0_9, %c0_10], %29 {strides = array<i32>} : memref<8x128xi32, #tpu.memory_space<vmem>>, vector<8x128xi32>,
    return
  }
  func.func @transform_0(%arg0: i32, %arg1: i32) -> (i32, i32) {
    %c1_i32 = arith.constant 1 : i32
    %0 = arith.muli %arg0, %c1_i32 : i32
    %1 = arith.addi %0, %arg1 : i32
    %c0_i32 = arith.constant 0 : i32
    %2 = arith.minsi %1, %c0_i32 : i32
    %c0_i32_0 = arith.constant 0 : i32
    %c0_i32_1 = arith.constant 0 : i32
    return %2, %c0_i32_0 : i32, i32
  }
  func.func @transform_1(%arg0: i32, %arg1: i32) -> (i32, i32) {
    %c1_i32 = arith.constant 1 : i32
    %0 = arith.muli %arg0, %c1_i32 : i32
    %1 = arith.addi %0, %arg1 : i32
    %c0_i32 = arith.constant 0 : i32
    %2 = arith.minsi %1, %c0_i32 : i32
    %c0_i32_0 = arith.constant 0 : i32
    %c0_i32_1 = arith.constant 0 : i32
    return %2, %c0_i32_0 : i32, i32
  }
  func.func @transform_2(%arg0: i32, %arg1: i32) -> (i32, i32) {
    %c0_i32 = arith.constant 0 : i32
    %c0_i32_0 = arith.constant 0 : i32
    return %arg0, %c0_i32 : i32, i32
  }
}

</mosaic_0001>

<llo_original>
// kernel: tpu_custom_call.1
$region0: #{tpu_custom_call.1}
  #allocation0 [shape = 'u32[]', space=smem, size = 0x4, offset = 0x4, fixed_abs, tag = 'smem constant byte address 0x4 - core index']
  #allocation1 [shape = 'u32[72,128]{1,0:T(1,128)}', space=vmem, size = 0x9000, scoped, tag = 'internal scratch']
  %s0 = inlined_call_operand.vmem [shape: f32[8,16], index: 0, kind: input, shape index: {}]
  %s1 = inlined_call_operand.vmem [shape: s32[8,1], index: 1, kind: input, shape index: {}]
  %s2 = inlined_call_operand.hbm [shape: s32[16,128], index: 2, kind: output, shape index: {}]
  %s3 = sld [smem:[#allocation0]]
  $region45: #{tpu_custom_call.1} parent=0
    _
  %s5 = ssub.s32 1, %s3
  %s6 = scalar_select 0, %s5, %s3
  $region1: #{tpu_custom_call.1} parent=0
    #allocation2 [shape = 'u8[8192]{0}', space=vmem, size = 0x2000, scoped, tag = 'output window, operand 0']
    #allocation3 [shape = 's32[2]{0}', space=sflag, size = 0x8, scoped, tag = 'scoped memory for tpu_custom_call.1']
    %7 = vsyncpa [#allocation3], 0
    %s8 = scalar_lea.sflag [#allocation3], 1
    %9 = vsyncpa %s8, 0
    loop: start=0, step=1, limit=4
    $region2: #{tpu_custom_call.1} parent=1 // loop_pre_header
      _
    $region3: #{tpu_custom_call.1} parent=1 // loop_header
      %s11 = sphi 0, %s15
      %p12 = scmp.ge.s32.totalorder %s11, 4
      %s18 = sphi 0, %s30
      %s19 = sphi 0, %s26
      %s20 = sphi 0, %s18
      %s21 = sphi 0, %s19
      %s22 = sphi 0, %s20
      %s23 = sphi 0, %s21
      %s39 = sphi 0, %s41
      %s42 = sphi 0, %s39
      %s43 = sphi 0, %s42
      %s59 = sphi 0, %s43
      %s71 = sphi 0, %s73
      %s74 = sphi 0, %s71
      %s75 = sphi 0, %s74
      %s91 = sphi 0, %s75
      %s97 = sphi 0, %s99
      %s100 = sphi 0, %s97
      %s101 = sphi 0, %s100
      %s117 = sphi 0, %s101
    $region4: #{tpu_custom_call.1} parent=1 // loop_header_branch
      %14 = sbr.rel (%p12) target = $region8
    $region5: #{tpu_custom_call.1} parent=1 // loop_body
      %s16 = ssub.s32 %s11, 1
      %s17 = ssub.s32 %s11, 2
      %s24 = sadd.s32 1, %s19
      %p25 = scmp.ge.s32.totalorder %s24, 1
      %s26 = scalar_select %p25, 0, %s24
      %s27 = sadd.s32 1, %s18
      %s28 = scalar_select %p25, %s27, %s18
      %p29 = scmp.ge.s32.totalorder %s28, 2
      %s30 = scalar_select %p29, 0, %s28
      %s31 = sadd.s32 %s18, %s19
      %p32 = scmp.lt.s32.totalorder %s31, 0
      %s33 = scalar_select %p32, %s31, 0
      %s34 = sadd.s32 %s30, %s26
      %p35 = scmp.lt.s32.totalorder %s34, 0
      %s36 = scalar_select %p35, %s34, 0
      %s37 = ssub.s32 %s33, %s36
      %p38 = scmp.eq.s32.totalorder %s37, 0
      %s40 = sadd.s32 %s39, 1
      %s41 = scalar_select %p38, %s39, %s40
      %p44 = pneg %p38
      %p45 = scmp.eq.s32.totalorder %s11, 1
      %p46 = por %p44, %p45
      %p47 = scmp.ne.s32.totalorder %s39, %s42
      %p48 = scmp.eq.s32.totalorder %s11, 0
      %p49 = por %p47, %p48
      %p50 = scmp.ne.s32.totalorder %s39, %s42
      %p51 = scmp.eq.s32.totalorder %s16, 1
      %p52 = por %p50, %p51
      %p53 = scmp.ne.s32.totalorder %s42, %s43
      %p54 = scmp.eq.s32.totalorder %s16, 0
      %p55 = por %p53, %p54
      %p56 = scmp.ne.s32.totalorder %s42, %s43
      %p57 = scmp.eq.s32.totalorder %s17, 1
      %p58 = por %p56, %p57
      %p60 = scmp.ne.s32.totalorder %s43, %s59
      %p61 = scmp.eq.s32.totalorder %s17, 0
      %p62 = por %p60, %p61
      %s63 = sadd.s32 %s18, %s19
      %p64 = scmp.lt.s32.totalorder %s63, 0
      %s65 = scalar_select %p64, %s63, 0
      %s66 = sadd.s32 %s30, %s26
      %p67 = scmp.lt.s32.totalorder %s66, 0
      %s68 = scalar_select %p67, %s66, 0
      %s69 = ssub.s32 %s65, %s68
      %p70 = scmp.eq.s32.totalorder %s69, 0
      %s72 = sadd.s32 %s71, 1
      %s73 = scalar_select %p70, %s71, %s72
      %p76 = pneg %p70
      %p77 = scmp.eq.s32.totalorder %s11, 1
      %p78 = por %p76, %p77
      %p79 = scmp.ne.s32.totalorder %s71, %s74
      %p80 = scmp.eq.s32.totalorder %s11, 0
      %p81 = por %p79, %p80
      %p82 = scmp.ne.s32.totalorder %s71, %s74
      %p83 = scmp.eq.s32.totalorder %s16, 1
      %p84 = por %p82, %p83
      %p85 = scmp.ne.s32.totalorder %s74, %s75
      %p86 = scmp.eq.s32.totalorder %s16, 0
      %p87 = por %p85, %p86
      %p88 = scmp.ne.s32.totalorder %s74, %s75
      %p89 = scmp.eq.s32.totalorder %s17, 1
      %p90 = por %p88, %p89
      %p92 = scmp.ne.s32.totalorder %s75, %s91
      %p93 = scmp.eq.s32.totalorder %s17, 0
      %p94 = por %p92, %p93
      %s95 = ssub.s32 %s18, %s30
      %p96 = scmp.eq.s32.totalorder %s95, 0
      %s98 = sadd.s32 %s97, 1
      %s99 = scalar_select %p96, %s97, %s98
      %p102 = pneg %p96
      %p103 = scmp.eq.s32.totalorder %s11, 1
      %p104 = por %p102, %p103
      %p105 = scmp.ne.s32.totalorder %s97, %s100
      %p106 = scmp.eq.s32.totalorder %s11, 0
      %p107 = por %p105, %p106
      %p108 = scmp.ne.s32.totalorder %s97, %s100
      %p109 = scmp.eq.s32.totalorder %s16, 1
      %p110 = por %p108, %p109
      %p111 = scmp.ne.s32.totalorder %s100, %s101
      %p112 = scmp.eq.s32.totalorder %s16, 0
      %p113 = por %p111, %p112
      %p114 = scmp.ne.s32.totalorder %s100, %s101
      %p115 = scmp.eq.s32.totalorder %s17, 1
      %p116 = por %p114, %p115
      %p118 = scmp.ne.s32.totalorder %s101, %s117
      %p119 = scmp.eq.s32.totalorder %s17, 0
      %p120 = por %p118, %p119
      %p121 = scmp.le.s32.totalorder 1, %s11
      %p122 = scmp.lt.s32.totalorder %s11, 3
      %p123 = pnand %p121, %p122
      %p124 = pneg %p123
      // Predicated region
      $region9: #{tpu_custom_call.1} parent=5 // pred_check
        _
      $region10: #{tpu_custom_call.1} parent=5 // pred_check_branch
        %126 = sbr.rel (%p123) target = $region12
      $region11: #{tpu_custom_call.1} parent=5 // pred_region
        %s127 = ssub.s32 %s11, 1
      $region12: #{tpu_custom_call.1} parent=5 // pred_fallthru
        _
      %p128 = scmp.lt.s32.totalorder %s11, 2
      // Predicated region
      $region13: #{tpu_custom_call.1} parent=5 // pred_check
        %p129 = pneg %p128
      $region14: #{tpu_custom_call.1} parent=5 // pred_check_branch
        %131 = sbr.rel (%p129) target = $region16
      $region15: #{tpu_custom_call.1} parent=5 // pred_region
        // Predicated region
        $region17: #{tpu_custom_call.1} parent=15 // pred_check
          %p132 = pneg %p49
        $region18: #{tpu_custom_call.1} parent=15 // pred_check_branch
          %134 = sbr.rel (%p132) target = $region20
        $region19: #{tpu_custom_call.1} parent=15 // pred_region
          %s135 = sadd.s32 %s18, %s19
          %p136 = scmp.lt.s32.totalorder %s135, 0
          %s137 = scalar_select %p136, %s135, 0
          %p138 = scmp.lt.s32.totalorder %s137, 0
          %s139 = scalar_select %p138, %s137, 0
          %s140 = smul.addr %s139, 8
          %s141 = scalar_lea.vmem %s0, %s140
          %s142 = sadd.s32 %s18, %s19
          %p143 = scmp.lt.s32.totalorder %s142, 0
          %s144 = scalar_select %p143, %s142, 0
        $region20: #{tpu_custom_call.1} parent=15 // pred_fallthru
          _
        // Predicated region
        $region21: #{tpu_custom_call.1} parent=15 // pred_check
          %p145 = pneg %p81
        $region22: #{tpu_custom_call.1} parent=15 // pred_check_branch
          %147 = sbr.rel (%p145) target = $region24
        $region23: #{tpu_custom_call.1} parent=15 // pred_region
          %s148 = sadd.s32 %s18, %s19
          %p149 = scmp.lt.s32.totalorder %s148, 0
          %s150 = scalar_select %p149, %s148, 0
          %p151 = scmp.lt.s32.totalorder %s150, 0
          %s152 = scalar_select %p151, %s150, 0
          %s153 = smul.addr %s152, 8
          %s154 = scalar_lea.vmem %s1, %s153
          %s155 = sadd.s32 %s18, %s19
          %p156 = scmp.lt.s32.totalorder %s155, 0
          %s157 = scalar_select %p156, %s155, 0
        $region24: #{tpu_custom_call.1} parent=15 // pred_fallthru
          _
      $region16: #{tpu_custom_call.1} parent=5 // pred_fallthru
        _
      %p158 = scmp.le.s32.totalorder 1, %s11
      %p159 = scmp.lt.s32.totalorder %s11, 3
      %p160 = pnand %p158, %p159
      %p161 = pneg %p160
      // Predicated region
      $region25: #{tpu_custom_call.1} parent=5 // pred_check
        _
      $region26: #{tpu_custom_call.1} parent=5 // pred_check_branch
        %163 = sbr.rel (%p160) target = $region28
      $region27: #{tpu_custom_call.1} parent=5 // pred_region
        %s164 = ssub.s32 %s11, 1
        %s165 = sadd.s32 %s20, %s21
        %p166 = scmp.lt.s32.totalorder %s165, 0
        %s167 = scalar_select %p166, %s165, 0
        %p168 = scmp.lt.s32.totalorder %s167, 0
        %s169 = scalar_select %p168, %s167, 0
        %s170 = smul.addr %s169, 8
        %s171 = scalar_lea.vmem %s0, %s170
        %p172 = pneg %p55
        %p173 = pneg %p52
        %s174 = sadd.s32 %s20, %s21
        %p175 = scmp.lt.s32.totalorder %s174, 0
        %s176 = scalar_select %p175, %s174, 0
        %p177 = scmp.lt.s32.totalorder %s176, 0
        %s178 = scalar_select %p177, %s176, 0
        %s179 = smul.addr %s178, 8
        %s180 = scalar_lea.vmem %s1, %s179
        %p181 = pneg %p87
        %p182 = pneg %p84
        %p183 = pneg %p113
        %p184 = pneg %p110
        %s185 = sand.u32 %s100, 1
        %s186 = scalar_lea.sflag [#allocation3], %s185
        %s187 = sand.u32 %s100, 1
        %s188 = smul.addr %s187, 8
        %s189 = scalar_lea.vmem [#allocation2], %s188
        %s190 = sadd.s32 %s20, %s21
        %p191 = scmp.lt.s32.totalorder %s190, 0
        %s192 = scalar_select %p191, %s190, 0
        %p193 = scmp.lt.s32.totalorder %s192, 0
        %s194 = scalar_select %p193, %s192, 0
        %s195 = smul.addr %s194, 8
        %s196 = scalar_lea.vmem %s0, %s195
        %s197 = sadd.s32 %s20, %s21
        %p198 = scmp.lt.s32.totalorder %s197, 0
        %s199 = scalar_select %p198, %s197, 0
        %s200 = sadd.s32 %s20, %s21
        %p201 = scmp.lt.s32.totalorder %s200, 0
        %s202 = scalar_select %p201, %s200, 0
        %p203 = scmp.lt.s32.totalorder %s202, 0
        %s204 = scalar_select %p203, %s202, 0
        %s205 = smul.addr %s204, 8
        %s206 = scalar_lea.vmem %s1, %s205
        %s207 = sadd.s32 %s20, %s21
        %p208 = scmp.lt.s32.totalorder %s207, 0
        %s209 = scalar_select %p208, %s207, 0
        %s210 = sadd.s32 %s20, %s21
        %p211 = scmp.eq.s32.totalorder %s21, 0
        // Predicated region
        $region29: #{tpu_custom_call.1} parent=27 // pred_check
          %p212 = pneg %p211
        $region30: #{tpu_custom_call.1} parent=27 // pred_check_branch
          %214 = sbr.rel (%p212) target = $region32
        $region31: #{tpu_custom_call.1} parent=27 // pred_region
          %215 = vst [vmem:[%s189] sm:$0xff] 0
        $region32: #{tpu_custom_call.1} parent=27 // pred_fallthru
          _
        %v216 = vld [vmem:[%s196] sm:$0xff]
        %v217 = vld [vmem:[%s206] sm:$0xff]
        %v218 = vlaneseq
        %v219 = vand.u32 %v218, 127
        %vm220 = vcmask 130048
        %v221 = vsel %vm220, %v216, -inf
        %222 = vmax.xlane.f32.xlu0 %v221
        %v223 = vpop.xlane.xlu0 %222
        %vm224 = vcmp.eq.f32.partialorder %v216, %v223
        %v225 = vsel %vm224, %v219, 16
        %v226 = vsel %vm220, %v225, 2147483647
        %v227 = vand.u32 %v226, 65535
        %v228 = vshra.s32 %v226, 16
        %v229 = vcvt.s32.f32 %v227
        %v230 = vcvt.s32.f32 %v228
        %231 = vmin.xlane.f32.xlu0 %v230
        %v232 = vpop.xlane.xlu0 %231
        %vm233 = vcmp.eq.f32.partialorder %v230, %v232
        %v234 = vsel %vm233, %v229, inf
        %235 = vmin.xlane.f32.xlu0 %v234
        %v236 = vpop.xlane.xlu0 %235
        %v237 = vcvt.f32.s32 %v236
        %v238 = vcvt.f32.s32 %v232
        %v239 = vshll.u32 %v238, 16
        %v240 = vadd.s32 %v239, %v237
        %v241 = vlaneseq
        %v242 = vshrl.u32 %v241, 7
        %s243 = smul.u32 %s210, 8
        %v244 = vstv %s243
        %v245 = vadd.s32 %v242, %v244
        %vm246 = vcmp.lt.s32.totalorder %v245, 8
        %vm247 = vcmp.eq.s32.totalorder %v240, %v217
        %vm248 = vmand %vm246, %vm247
        %v249 = vsel %vm248, 1, 0
        %v250 = vld [vmem:[%s189] sm:$0xff]
        %vm251 = vcmask 7168
        %v252 = vsel %vm251, %v249, 0
        %v253 = vrot.slane %v252, 4
        %v254 = vadd.s32 %v252, %v253
        %v255 = vrot.slane %v254, 2
        %v256 = vadd.s32 %v254, %v255
        %v257 = vrot.slane %v256, 1
        %v258 = vadd.s32 %v256, %v257
        %259 = vset.pattern.permute.xlu0 0
        %260 = vperm.xlu0 %259, %v258
        %v261 = vpop.permute.xlu0 %260
        %v262 = vadd.s32 %v250, %v261
        %263 = vst [vmem:[%s189] sm:$0xff] %v262
        %s264 = sand.u32 %s100, 1
        %s265 = scalar_lea.sflag [#allocation3], %s264
        %s266 = sand.u32 %s100, 1
        %s267 = smul.addr %s266, 8
        %s268 = scalar_lea.vmem [#allocation2], %s267
        // Predicated region
        $region33: #{tpu_custom_call.1} parent=27 // pred_check
          %p269 = pneg %p110
        $region34: #{tpu_custom_call.1} parent=27 // pred_check_branch
          %271 = sbr.rel (%p269) target = $region36
        $region35: #{tpu_custom_call.1} parent=27 // pred_region
          %273 = vsyncadd %s265, 0
          %s274 = smul.addr %s20, 8
          %s275 = scalar_lea.hbm %s2, %s274
          %s277 = sshll.u32 %s268, 4
          %s278 = int_to_ptr.vmem [resolvable:$true] %s277
          %s279 = sshll.u32 %s275, 4
          %s280 = int_to_ptr.hbm [resolvable:$true] %s279
          %282 = dma.vmem_to_hbm [thread:$0]  %s278, 128, %s280, %s265
        $region36: #{tpu_custom_call.1} parent=27 // pred_fallthru
          _
      $region28: #{tpu_custom_call.1} parent=5 // pred_fallthru
        _
      %p283 = scmp.le.s32.totalorder 2, %s11
      // Predicated region
      $region37: #{tpu_custom_call.1} parent=5 // pred_check
        %p284 = pneg %p283
      $region38: #{tpu_custom_call.1} parent=5 // pred_check_branch
        %286 = sbr.rel (%p284) target = $region40
      $region39: #{tpu_custom_call.1} parent=5 // pred_region
        %s287 = ssub.s32 %s11, 2
        // Predicated region
        $region41: #{tpu_custom_call.1} parent=39 // pred_check
          %p288 = pneg %p116
        $region42: #{tpu_custom_call.1} parent=39 // pred_check_branch
          %290 = sbr.rel (%p288) target = $region44
        $region43: #{tpu_custom_call.1} parent=39 // pred_region
          %s291 = sand.u32 %s101, 1
          %s292 = scalar_lea.sflag [#allocation3], %s291
          %s293 = sand.u32 %s101, 1
          %s294 = smul.addr %s293, 8
          %s295 = scalar_lea.vmem [#allocation2], %s294
          %297 = dma.done %s292, 128
        $region44: #{tpu_custom_call.1} parent=39 // pred_fallthru
          _
      $region40: #{tpu_custom_call.1} parent=5 // pred_fallthru
        _
    $region6: #{tpu_custom_call.1} parent=1 // loop_footer
      %s15 = sadd.s32 1, %s11
    $region7: #{tpu_custom_call.1} parent=1 // loop_footer_branch
      %10 = sbr.rel target = $region3
    $region8: #{tpu_custom_call.1} parent=1 // loop_exit
      _
    %298 = vsyncpa [#allocation3], 1
    %s299 = scalar_lea.sflag [#allocation3], 1
    %300 = vsyncpa %s299, 1

</llo_original>
